<compile_context>
chip_gen: v7x
topology: tpu7x:2x2x1
jax: 0.10.0
libtpu: 0.0.40
codegen_flags: <defaults>
</compile_context>

<pallas_src>
import functools

import jax
import jax.numpy as jnp
from jax.experimental import pallas as pl
from jax.experimental.pallas import tpu as pltpu


def _round_up(x, m):
    return ((x + m - 1) // m) * m


def _finalize(acc_ref, scale_ref, fcw_ref, fcb_ref, out_ref):
    # sum-then-divide (exact EmbeddingBag(mode='mean') numerics), then the head.
    pooled = acc_ref[...] * scale_ref[...]                       # (B_acc, D_pad)
    logits = jnp.dot(pooled, fcw_ref[...],
                     preferred_element_type=jnp.float32) + fcb_ref[...]
    out_ref[...] = logits.astype(out_ref.dtype)


# ----------------------------------------------------------------------------
# Path A: embedding table resident in VMEM (small vocab / v5e / v6e).
# ----------------------------------------------------------------------------
def _kernel_table_vmem(tok,                                   # static
                       ids_ref, bags_ref,                     # scalar prefetch
                       emb_ref, fcw_ref, fcb_ref, scale_ref,  # VMEM inputs
                       out_ref,                               # VMEM output
                       acc_ref):                              # scratch
    s = pl.program_id(0)

    @pl.when(s == 0)
    def _init():
        acc_ref[...] = jnp.zeros_like(acc_ref)

    base = s * tok
    for j in range(tok):                                      # static unroll
        row = emb_ref[pl.ds(ids_ref[base + j], 1), :].astype(jnp.float32)
        bag = bags_ref[base + j]
        acc_ref[pl.ds(bag, 1), :] += row                      # dynamic row accumulate

    @pl.when(s == pl.num_programs(0) - 1)
    def _finish():
        _finalize(acc_ref, scale_ref, fcw_ref, fcb_ref, out_ref)


# ----------------------------------------------------------------------------
# Path B: table stays in HBM; manual double-buffered per-row DMA gather.
# ----------------------------------------------------------------------------
def _kernel_table_hbm(tok,                                    # static
                      ids_ref, bags_ref,                      # scalar prefetch
                      emb_hbm, fcw_ref, fcb_ref, scale_ref,   # emb is raw HBM ref
                      out_ref,                                # VMEM output
                      acc_ref, stage_ref, dma_sems):          # scratch
    s = pl.program_id(0)
    n_steps = pl.num_programs(0)
    slot = s % 2

    def start_row(step, buf_slot, j):
        pltpu.make_async_copy(
            emb_hbm.at[pl.ds(ids_ref[step * tok + j], 1), :],
            stage_ref.at[buf_slot, pl.ds(j, 1), :],
            dma_sems.at[buf_slot, j]).start()

    def wait_row(buf_slot, j):
        # wait only needs dst size + semaphore; constant src avoids SMEM reads
        # next to the wait.
        pltpu.make_async_copy(
            emb_hbm.at[pl.ds(0, 1), :],
            stage_ref.at[buf_slot, pl.ds(j, 1), :],
            dma_sems.at[buf_slot, j]).wait()

    @pl.when(s == 0)
    def _init():
        acc_ref[...] = jnp.zeros_like(acc_ref)
        for j in range(tok):
            start_row(0, 0, j)

    # Prefetch the next step's rows into the other buffer while this step works.
    @pl.when(s + 1 < n_steps)
    def _prefetch():
        for j in range(tok):
            start_row(s + 1, 1 - slot, j)

    base = s * tok
    bag_j = [bags_ref[base + j] for j in range(tok)]          # scalar reads before waits

    for j in range(tok):
        wait_row(slot, j)
        row = stage_ref[slot, pl.ds(j, 1), :].astype(jnp.float32)
        acc_ref[pl.ds(bag_j[j], 1), :] += row                 # dynamic row accumulate

    @pl.when(s == n_steps - 1)
    def _finish():
        _finalize(acc_ref, scale_ref, fcw_ref, fcb_ref, out_ref)


# ----------------------------------------------------------------------------
# Wrapper
# ----------------------------------------------------------------------------
def text_classification_forward(text, offsets, emb_w, fc_w, fc_b,
                                *, tokens_per_step=8,
                                table_vmem_bytes_max=8 * 1024 * 1024):
    """EmbeddingBag(mode='mean') + Linear.

    text:    (T,) int token ids (all bags concatenated)
    offsets: (B,) int bag start offsets (PyTorch convention, offsets[0] == 0)
    emb_w:   (V, D) f32/bf16, fc_w: (C, D) f32, fc_b: (C,) f32
    returns: (B, C) f32 logits
    """
    T = int(text.shape[0])
    B = int(offsets.shape[0])
    V, D = emb_w.shape
    C = fc_w.shape[0]

    tok = max(1, int(tokens_per_step))
    D_pad = _round_up(D, 128)
    C_pad = _round_up(C, 128)
    V_pad = _round_up(V, 8)
    B_acc = _round_up(B + 1, 8)          # +1 "trash" row for padding tokens
    T_pad = _round_up(max(T, 1), tok)
    n_steps = T_pad // tok

    # --- scalar bookkeeping (SMEM via scalar prefetch) ------------------------
    offsets = offsets.astype(jnp.int32)
    ends = jnp.concatenate([offsets[1:], jnp.array([T], jnp.int32)])
    tok_idx = jnp.arange(T, dtype=jnp.int32)
    bag_of_tok = (jnp.searchsorted(offsets, tok_idx, side='right') - 1).astype(jnp.int32)
    counts = (ends - offsets).astype(jnp.int32)

    ids = jnp.zeros((T_pad,), jnp.int32).at[:T].set(text.astype(jnp.int32))
    bags = jnp.full((T_pad,), B, jnp.int32).at[:T].set(bag_of_tok)  # pad -> trash row

    # Per-bag reciprocal counts, applied once at finalize. Empty / trash / pad
    # rows get scale 0 (empty bags -> zero pooled vector, matching PyTorch).
    inv_cnt = jnp.where(counts > 0,
                        1.0 / jnp.maximum(counts, 1).astype(jnp.float32), 0.0)
    scale = jnp.zeros((B_acc, 1), jnp.float32).at[:B, 0].set(inv_cnt)

    # --- one-time layout plumbing ---------------------------------------------
    emb_p = jnp.zeros((V_pad, D_pad), emb_w.dtype).at[:V, :D].set(emb_w)
    fcw_t = jnp.zeros((D_pad, C_pad), jnp.float32).at[:D, :C].set(
        fc_w.astype(jnp.float32).T)
    fcb_p = jnp.zeros((1, C_pad), jnp.float32).at[0, :C].set(fc_b.astype(jnp.float32))

    table_bytes = int(V_pad) * int(D_pad) * emb_p.dtype.itemsize
    table_in_vmem = table_bytes <= int(table_vmem_bytes_max)

    const2 = lambda s, *prefetch: (0, 0)

    common_in_specs = [
        pl.BlockSpec((D_pad, C_pad), const2),     # fc weight (pre-transposed, lane-dense)
        pl.BlockSpec((1, C_pad), const2),         # fc bias
        pl.BlockSpec((B_acc, 1), const2),         # per-bag 1/count
    ]
    scratch = [pltpu.VMEM((B_acc, D_pad), jnp.float32)]        # bag-sum accumulator

    vmem_limit = None
    if table_in_vmem:
        kernel = functools.partial(_kernel_table_vmem, tok)
        emb_spec = pl.BlockSpec((V_pad, D_pad), const2)
        # Constant-index block is double-buffered by default -> budget 2x table.
        if 2 * table_bytes + (8 << 20) > (16 << 20):
            vmem_limit = min(48 << 20, 2 * table_bytes + (8 << 20))
    else:
        kernel = functools.partial(_kernel_table_hbm, tok)
        emb_spec = pl.BlockSpec(memory_space=pl.ANY)           # raw HBM ref
        scratch = scratch + [
            pltpu.VMEM((2, tok, D_pad), emb_p.dtype),          # double-buffered row staging
            pltpu.SemaphoreType.DMA((2, tok)),
        ]

    grid_spec = pltpu.PrefetchScalarGridSpec(
        num_scalar_prefetch=2,
        grid=(n_steps,),
        in_specs=[emb_spec] + common_in_specs,
        out_specs=pl.BlockSpec((B_acc, C_pad), const2),
        scratch_shapes=scratch,
    )

    out = pl.pallas_call(
        kernel,
        out_shape=jax.ShapeDtypeStruct((B_acc, C_pad), jnp.float32),
        grid_spec=grid_spec,
        compiler_params=pltpu.CompilerParams(
            dimension_semantics=("arbitrary",),
            vmem_limit_bytes=vmem_limit),
    )(ids, bags, emb_p, fcw_t, fcb_p, scale)

    return out[:B, :C]


def reference_forward(text, offsets, emb_w, fc_w, fc_b):
    """Pure-JAX reference of EmbeddingBag(mean) + Linear."""
    T = text.shape[0]
    ends = jnp.concatenate([offsets[1:], jnp.array([T], dtype=offsets.dtype)])
    gathered = emb_w[text]                                     # (T, D)
    tok = jnp.arange(T)[None, :]
    mask = (tok >= offsets[:, None]) & (tok < ends[:, None])
    count = jnp.maximum(ends - offsets, 1).astype(jnp.float32)[:, None]
    pooled = (mask.astype(jnp.float32) @ gathered) / count     # (B, D)
    return pooled @ fc_w.T + fc_b[None, :]


if __name__ == "__main__":
    # Small synthetic config consistent with the module's forward.
    vocab_size = 32
    embed_dim = 32
    num_class = 2
    T = 16            # total tokens across all bags
    B = 2             # batch (number of bags)

    key = jax.random.PRNGKey(0)
    k_emb, k_fcw, k_text = jax.random.split(key, 3)

    # init_weights(): uniform(-0.5, 0.5) for embedding and fc weight, zero bias.
    initrange = 0.5
    emb_w = jax.random.uniform(k_emb, (vocab_size, embed_dim),
                               minval=-initrange, maxval=initrange,
                               dtype=jnp.float32)
    fc_w = jax.random.uniform(k_fcw, (num_class, embed_dim),
                              minval=-initrange, maxval=initrange,
                              dtype=jnp.float32)
    fc_b = jnp.zeros((num_class,), dtype=jnp.float32)

    text = jax.random.randint(k_text, (T,), 0, vocab_size, dtype=jnp.int32)
    offsets = jnp.array([0, 9], dtype=jnp.int32)  # bag 0: [0,9), bag 1: [9,16)

    ref = reference_forward(text, offsets, emb_w, fc_w, fc_b)

    # Path A: small vocab -> table resident in VMEM, in-kernel row gather.
    out_vmem = jax.block_until_ready(
        text_classification_forward(text, offsets, emb_w, fc_w, fc_b))
    assert out_vmem.shape == (B, num_class)
    assert jnp.allclose(out_vmem, ref, atol=1e-4, rtol=1e-4), (out_vmem, ref)

    # Path B: large-vocab / v7x fallback -> table stays in HBM, manual
    # double-buffered per-row DMA gather (forced by zeroing the threshold).
    out_hbm = jax.block_until_ready(
        text_classification_forward(text, offsets, emb_w, fc_w, fc_b,
                                    table_vmem_bytes_max=0))
    assert jnp.allclose(out_hbm, ref, atol=1e-4, rtol=1e-4), (out_hbm, ref)

    # Empty-bag case (duplicate offsets) + a step size that forces padding
    # tokens (exercises the trash-row path). bag 0 is empty -> logits = bias.
    offsets_e = jnp.array([0, 0, 9], dtype=jnp.int32)
    ref_e = reference_forward(text, offsets_e, emb_w, fc_w, fc_b)
    out_e = jax.block_until_ready(
        text_classification_forward(text, offsets_e, emb_w, fc_w, fc_b,
                                    tokens_per_step=6))
    assert jnp.allclose(out_e, ref_e, atol=1e-4, rtol=1e-4), (out_e, ref_e)

    print("KERNEL_OK")
</pallas_src>

<mosaic_0001>
module attributes {stable_mosaic.version = 11 : i64} {
  func.func @_kernel_table_vmem(%arg0: i32, %arg1: memref<16xi32, #tpu.memory_space<smem>>, %arg2: memref<16xi32, #tpu.memory_space<smem>>, %arg3: memref<32x128xf32, #tpu.memory_space<vmem>>, %arg4: memref<128x128xf32, #tpu.memory_space<vmem>>, %arg5: memref<1x128xf32, #tpu.memory_space<vmem>>, %arg6: memref<8x1xf32, #tpu.memory_space<vmem>>, %arg7: memref<8x128xf32, #tpu.memory_space<vmem>>, %arg8: memref<8x128xf32, #tpu.memory_space<vmem>>) attributes {dimension_semantics = [#tpu.dimension_semantics<arbitrary>], iteration_bounds = array<i64: 2>, scalar_prefetch = 2 : i64, scratch_operands = 1 : i64, tpu.core_type = #tpu.core_type<tc>, window_params = [{pipeline_mode = #tpu.pipeline_mode<synchronous>, transform_indices = @transform_0, window_bounds = array<i64: 32, 128>}, {pipeline_mode = #tpu.pipeline_mode<synchronous>, transform_indices = @transform_1, window_bounds = array<i64: 128, 128>}, {pipeline_mode = #tpu.pipeline_mode<synchronous>, transform_indices = @transform_2, window_bounds = array<i64: 1, 128>}, {pipeline_mode = #tpu.pipeline_mode<synchronous>, transform_indices = @transform_3, window_bounds = array<i64: 8, 1>}, {pipeline_mode = #tpu.pipeline_mode<synchronous>, transform_indices = @transform_4, window_bounds = array<i64: 8, 128>}]} {
    %c0_i32 = arith.constant 0 : i32
    %0 = arith.cmpi eq, %arg0, %c0_i32 : i32
    %1 = arith.extui %0 : i1 to i32
    %c0_i32_0 = arith.constant 0 : i32
    %2 = arith.cmpi ne, %1, %c0_i32_0 : i32
    scf.if %2 {
      %cst = arith.constant 0.000000e+00 : f32
      %111 = vector.broadcast %cst : f32 to vector<8x128xf32>
      %c0_35 = arith.constant 0 : index
      %c0_36 = arith.constant 0 : index
      %112 = vector.load %arg8[%c0_35, %c0_36] : memref<8x128xf32, #tpu.memory_space<vmem>>, vector<8x128xf32>
      tpu.vector_store %arg8[%c0_35, %c0_36], %111 {strides = array<i32>} : memref<8x128xf32, #tpu.memory_space<vmem>>, vector<8x128xf32>,
    } else {
    }
    %c8_i32 = arith.constant 8 : i32
    %3 = arith.muli %arg0, %c8_i32 : i32
    %c0_i32_1 = arith.constant 0 : i32
    %4 = arith.addi %3, %c0_i32_1 : i32
    %5 = arith.index_cast %4 : i32 to index
    %6 = memref.load %arg1[%5] : memref<16xi32, #tpu.memory_space<smem>>
    %7 = arith.index_cast %6 : i32 to index
    %c0 = arith.constant 0 : index
    %8 = vector.load %arg3[%7, %c0] : memref<32x128xf32, #tpu.memory_space<vmem>>, vector<1x128xf32>
    %c0_i32_2 = arith.constant 0 : i32
    %9 = arith.addi %3, %c0_i32_2 : i32
    %10 = arith.index_cast %9 : i32 to index
    %11 = memref.load %arg2[%10] : memref<16xi32, #tpu.memory_space<smem>>
    %12 = arith.index_cast %11 : i32 to index
    %c0_3 = arith.constant 0 : index
    %13 = vector.load %arg8[%12, %c0_3] : memref<8x128xf32, #tpu.memory_space<vmem>>, vector<1x128xf32>
    %14 = arith.addf %13, %8 : vector<1x128xf32>
    %15 = arith.index_cast %11 : i32 to index
    %c0_4 = arith.constant 0 : index
    %16 = vector.load %arg8[%15, %c0_4] : memref<8x128xf32, #tpu.memory_space<vmem>>, vector<1x128xf32>
    tpu.vector_store %arg8[%15, %c0_4], %14 {strides = array<i32>} : memref<8x128xf32, #tpu.memory_space<vmem>>, vector<1x128xf32>,
    %c1_i32 = arith.constant 1 : i32
    %17 = arith.addi %3, %c1_i32 : i32
    %18 = arith.index_cast %17 : i32 to index
    %19 = memref.load %arg1[%18] : memref<16xi32, #tpu.memory_space<smem>>
    %20 = arith.index_cast %19 : i32 to index
    %c0_5 = arith.constant 0 : index
    %21 = vector.load %arg3[%20, %c0_5] : memref<32x128xf32, #tpu.memory_space<vmem>>, vector<1x128xf32>
    %c1_i32_6 = arith.constant 1 : i32
    %22 = arith.addi %3, %c1_i32_6 : i32
    %23 = arith.index_cast %22 : i32 to index
    %24 = memref.load %arg2[%23] : memref<16xi32, #tpu.memory_space<smem>>
    %25 = arith.index_cast %24 : i32 to index
    %c0_7 = arith.constant 0 : index
    %26 = vector.load %arg8[%25, %c0_7] : memref<8x128xf32, #tpu.memory_space<vmem>>, vector<1x128xf32>
    %27 = arith.addf %26, %21 : vector<1x128xf32>
    %28 = arith.index_cast %24 : i32 to index
    %c0_8 = arith.constant 0 : index
    %29 = vector.load %arg8[%28, %c0_8] : memref<8x128xf32, #tpu.memory_space<vmem>>, vector<1x128xf32>
    tpu.vector_store %arg8[%28, %c0_8], %27 {strides = array<i32>} : memref<8x128xf32, #tpu.memory_space<vmem>>, vector<1x128xf32>,
    %c2_i32 = arith.constant 2 : i32
    %30 = arith.addi %3, %c2_i32 : i32
    %31 = arith.index_cast %30 : i32 to index
    %32 = memref.load %arg1[%31] : memref<16xi32, #tpu.memory_space<smem>>
    %33 = arith.index_cast %32 : i32 to index
    %c0_9 = arith.constant 0 : index
    %34 = vector.load %arg3[%33, %c0_9] : memref<32x128xf32, #tpu.memory_space<vmem>>, vector<1x128xf32>
    %c2_i32_10 = arith.constant 2 : i32
    %35 = arith.addi %3, %c2_i32_10 : i32
    %36 = arith.index_cast %35 : i32 to index
    %37 = memref.load %arg2[%36] : memref<16xi32, #tpu.memory_space<smem>>
    %38 = arith.index_cast %37 : i32 to index
    %c0_11 = arith.constant 0 : index
    %39 = vector.load %arg8[%38, %c0_11] : memref<8x128xf32, #tpu.memory_space<vmem>>, vector<1x128xf32>
    %40 = arith.addf %39, %34 : vector<1x128xf32>
    %41 = arith.index_cast %37 : i32 to index
    %c0_12 = arith.constant 0 : index
    %42 = vector.load %arg8[%41, %c0_12] : memref<8x128xf32, #tpu.memory_space<vmem>>, vector<1x128xf32>
    tpu.vector_store %arg8[%41, %c0_12], %40 {strides = array<i32>} : memref<8x128xf32, #tpu.memory_space<vmem>>, vector<1x128xf32>,
    %c3_i32 = arith.constant 3 : i32
    %43 = arith.addi %3, %c3_i32 : i32
    %44 = arith.index_cast %43 : i32 to index
    %45 = memref.load %arg1[%44] : memref<16xi32, #tpu.memory_space<smem>>
    %46 = arith.index_cast %45 : i32 to index
    %c0_13 = arith.constant 0 : index
    %47 = vector.load %arg3[%46, %c0_13] : memref<32x128xf32, #tpu.memory_space<vmem>>, vector<1x128xf32>
    %c3_i32_14 = arith.constant 3 : i32
    %48 = arith.addi %3, %c3_i32_14 : i32
    %49 = arith.index_cast %48 : i32 to index
    %50 = memref.load %arg2[%49] : memref<16xi32, #tpu.memory_space<smem>>
    %51 = arith.index_cast %50 : i32 to index
    %c0_15 = arith.constant 0 : index
    %52 = vector.load %arg8[%51, %c0_15] : memref<8x128xf32, #tpu.memory_space<vmem>>, vector<1x128xf32>
    %53 = arith.addf %52, %47 : vector<1x128xf32>
    %54 = arith.index_cast %50 : i32 to index
    %c0_16 = arith.constant 0 : index
    %55 = vector.load %arg8[%54, %c0_16] : memref<8x128xf32, #tpu.memory_space<vmem>>, vector<1x128xf32>
    tpu.vector_store %arg8[%54, %c0_16], %53 {strides = array<i32>} : memref<8x128xf32, #tpu.memory_space<vmem>>, vector<1x128xf32>,
    %c4_i32 = arith.constant 4 : i32
    %56 = arith.addi %3, %c4_i32 : i32
    %57 = arith.index_cast %56 : i32 to index
    %58 = memref.load %arg1[%57] : memref<16xi32, #tpu.memory_space<smem>>
    %59 = arith.index_cast %58 : i32 to index
    %c0_17 = arith.constant 0 : index
    %60 = vector.load %arg3[%59, %c0_17] : memref<32x128xf32, #tpu.memory_space<vmem>>, vector<1x128xf32>
    %c4_i32_18 = arith.constant 4 : i32
    %61 = arith.addi %3, %c4_i32_18 : i32
    %62 = arith.index_cast %61 : i32 to index
    %63 = memref.load %arg2[%62] : memref<16xi32, #tpu.memory_space<smem>>
    %64 = arith.index_cast %63 : i32 to index
    %c0_19 = arith.constant 0 : index
    %65 = vector.load %arg8[%64, %c0_19] : memref<8x128xf32, #tpu.memory_space<vmem>>, vector<1x128xf32>
    %66 = arith.addf %65, %60 : vector<1x128xf32>
    %67 = arith.index_cast %63 : i32 to index
    %c0_20 = arith.constant 0 : index
    %68 = vector.load %arg8[%67, %c0_20] : memref<8x128xf32, #tpu.memory_space<vmem>>, vector<1x128xf32>
    tpu.vector_store %arg8[%67, %c0_20], %66 {strides = array<i32>} : memref<8x128xf32, #tpu.memory_space<vmem>>, vector<1x128xf32>,
    %c5_i32 = arith.constant 5 : i32
    %69 = arith.addi %3, %c5_i32 : i32
    %70 = arith.index_cast %69 : i32 to index
    %71 = memref.load %arg1[%70] : memref<16xi32, #tpu.memory_space<smem>>
    %72 = arith.index_cast %71 : i32 to index
    %c0_21 = arith.constant 0 : index
    %73 = vector.load %arg3[%72, %c0_21] : memref<32x128xf32, #tpu.memory_space<vmem>>, vector<1x128xf32>
    %c5_i32_22 = arith.constant 5 : i32
    %74 = arith.addi %3, %c5_i32_22 : i32
    %75 = arith.index_cast %74 : i32 to index
    %76 = memref.load %arg2[%75] : memref<16xi32, #tpu.memory_space<smem>>
    %77 = arith.index_cast %76 : i32 to index
    %c0_23 = arith.constant 0 : index
    %78 = vector.load %arg8[%77, %c0_23] : memref<8x128xf32, #tpu.memory_space<vmem>>, vector<1x128xf32>
    %79 = arith.addf %78, %73 : vector<1x128xf32>
    %80 = arith.index_cast %76 : i32 to index
    %c0_24 = arith.constant 0 : index
    %81 = vector.load %arg8[%80, %c0_24] : memref<8x128xf32, #tpu.memory_space<vmem>>, vector<1x128xf32>
    tpu.vector_store %arg8[%80, %c0_24], %79 {strides = array<i32>} : memref<8x128xf32, #tpu.memory_space<vmem>>, vector<1x128xf32>,
    %c6_i32 = arith.constant 6 : i32
    %82 = arith.addi %3, %c6_i32 : i32
    %83 = arith.index_cast %82 : i32 to index
    %84 = memref.load %arg1[%83] : memref<16xi32, #tpu.memory_space<smem>>
    %85 = arith.index_cast %84 : i32 to index
    %c0_25 = arith.constant 0 : index
    %86 = vector.load %arg3[%85, %c0_25] : memref<32x128xf32, #tpu.memory_space<vmem>>, vector<1x128xf32>
    %c6_i32_26 = arith.constant 6 : i32
    %87 = arith.addi %3, %c6_i32_26 : i32
    %88 = arith.index_cast %87 : i32 to index
    %89 = memref.load %arg2[%88] : memref<16xi32, #tpu.memory_space<smem>>
    %90 = arith.index_cast %89 : i32 to index
    %c0_27 = arith.constant 0 : index
    %91 = vector.load %arg8[%90, %c0_27] : memref<8x128xf32, #tpu.memory_space<vmem>>, vector<1x128xf32>
    %92 = arith.addf %91, %86 : vector<1x128xf32>
    %93 = arith.index_cast %89 : i32 to index
    %c0_28 = arith.constant 0 : index
    %94 = vector.load %arg8[%93, %c0_28] : memref<8x128xf32, #tpu.memory_space<vmem>>, vector<1x128xf32>
    tpu.vector_store %arg8[%93, %c0_28], %92 {strides = array<i32>} : memref<8x128xf32, #tpu.memory_space<vmem>>, vector<1x128xf32>,
    %c7_i32 = arith.constant 7 : i32
    %95 = arith.addi %3, %c7_i32 : i32
    %96 = arith.index_cast %95 : i32 to index
    %97 = memref.load %arg1[%96] : memref<16xi32, #tpu.memory_space<smem>>
    %98 = arith.index_cast %97 : i32 to index
    %c0_29 = arith.constant 0 : index
    %99 = vector.load %arg3[%98, %c0_29] : memref<32x128xf32, #tpu.memory_space<vmem>>, vector<1x128xf32>
    %c7_i32_30 = arith.constant 7 : i32
    %100 = arith.addi %3, %c7_i32_30 : i32
    %101 = arith.index_cast %100 : i32 to index
    %102 = memref.load %arg2[%101] : memref<16xi32, #tpu.memory_space<smem>>
    %103 = arith.index_cast %102 : i32 to index
    %c0_31 = arith.constant 0 : index
    %104 = vector.load %arg8[%103, %c0_31] : memref<8x128xf32, #tpu.memory_space<vmem>>, vector<1x128xf32>
    %105 = arith.addf %104, %99 : vector<1x128xf32>
    %106 = arith.index_cast %102 : i32 to index
    %c0_32 = arith.constant 0 : index
    %107 = vector.load %arg8[%106, %c0_32] : memref<8x128xf32, #tpu.memory_space<vmem>>, vector<1x128xf32>
    tpu.vector_store %arg8[%106, %c0_32], %105 {strides = array<i32>} : memref<8x128xf32, #tpu.memory_space<vmem>>, vector<1x128xf32>,
    %c1_i32_33 = arith.constant 1 : i32
    %108 = arith.cmpi eq, %arg0, %c1_i32_33 : i32
    %109 = arith.extui %108 : i1 to i32
    %c0_i32_34 = arith.constant 0 : i32
    %110 = arith.cmpi ne, %109, %c0_i32_34 : i32
    scf.if %110 {
      %c0_35 = arith.constant 0 : index
      %c0_36 = arith.constant 0 : index
      %111 = vector.load %arg8[%c0_35, %c0_36] : memref<8x128xf32, #tpu.memory_space<vmem>>, vector<8x128xf32>
      %c0_37 = arith.constant 0 : index
      %c0_38 = arith.constant 0 : index
      %112 = vector.load %arg6[%c0_37, %c0_38] : memref<8x1xf32, #tpu.memory_space<vmem>>, vector<8x1xf32>
      %113 = vector.broadcast %112 : vector<8x1xf32> to vector<8x128xf32>
      %114 = arith.mulf %111, %113 : vector<8x128xf32>
      %c0_39 = arith.constant 0 : index
      %c0_40 = arith.constant 0 : index
      %115 = vector.load %arg4[%c0_39, %c0_40] : memref<128x128xf32, #tpu.memory_space<vmem>>, vector<128x128xf32>
      %cst = arith.constant dense<0.000000e+00> : vector<8x128xf32>
      %116 = tpu.matmul %114, %115, %cst {dimension_numbers = #tpu.dot_dimension_numbers<[1], [0], [0], [1], [0, 0, 1, 1], [], []>} : vector<8x128xf32>, vector<128x128xf32>, vector<8x128xf32> -> vector<8x128xf32>
      %c0_41 = arith.constant 0 : index
      %c0_42 = arith.constant 0 : index
      %117 = vector.load %arg5[%c0_41, %c0_42] : memref<1x128xf32, #tpu.memory_space<vmem>>, vector<1x128xf32>
      %118 = vector.broadcast %117 : vector<1x128xf32> to vector<8x128xf32>
      %119 = arith.addf %116, %118 : vector<8x128xf32>
      %c0_43 = arith.constant 0 : index
      %c0_44 = arith.constant 0 : index
      %120 = vector.load %arg7[%c0_43, %c0_44] : memref<8x128xf32, #tpu.memory_space<vmem>>, vector<8x128xf32>
      tpu.vector_store %arg7[%c0_43, %c0_44], %119 {strides = array<i32>} : memref<8x128xf32, #tpu.memory_space<vmem>>, vector<8x128xf32>,
    } else {
    }
    return
  }
  func.func @transform_0(%arg0: i32, %arg1: memref<16xi32, #tpu.memory_space<smem>>, %arg2: memref<16xi32, #tpu.memory_space<smem>>) -> (i32, i32) {
    %c0_i32 = arith.constant 0 : i32
    %c0_i32_0 = arith.constant 0 : i32
    %c0_i32_1 = arith.constant 0 : i32
    return %c0_i32, %c0_i32_0 : i32, i32
  }
  func.func @transform_1(%arg0: i32, %arg1: memref<16xi32, #tpu.memory_space<smem>>, %arg2: memref<16xi32, #tpu.memory_space<smem>>) -> (i32, i32) {
    %c0_i32 = arith.constant 0 : i32
    %c0_i32_0 = arith.constant 0 : i32
    %c0_i32_1 = arith.constant 0 : i32
    return %c0_i32, %c0_i32_0 : i32, i32
  }
  func.func @transform_2(%arg0: i32, %arg1: memref<16xi32, #tpu.memory_space<smem>>, %arg2: memref<16xi32, #tpu.memory_space<smem>>) -> (i32, i32) {
    %c0_i32 = arith.constant 0 : i32
    %c0_i32_0 = arith.constant 0 : i32
    %c0_i32_1 = arith.constant 0 : i32
    return %c0_i32, %c0_i32_0 : i32, i32
  }
  func.func @transform_3(%arg0: i32, %arg1: memref<16xi32, #tpu.memory_space<smem>>, %arg2: memref<16xi32, #tpu.memory_space<smem>>) -> (i32, i32) {
    %c0_i32 = arith.constant 0 : i32
    %c0_i32_0 = arith.constant 0 : i32
    %c0_i32_1 = arith.constant 0 : i32
    return %c0_i32, %c0_i32_0 : i32, i32
  }
  func.func @transform_4(%arg0: i32, %arg1: memref<16xi32, #tpu.memory_space<smem>>, %arg2: memref<16xi32, #tpu.memory_space<smem>>) -> (i32, i32) {
    %c0_i32 = arith.constant 0 : i32
    %c0_i32_0 = arith.constant 0 : i32
    %c0_i32_1 = arith.constant 0 : i32
    return %c0_i32, %c0_i32_0 : i32, i32
  }
}

</mosaic_0001>

<llo_original>
// kernel: tpu_custom_call.1
$region0: #{tpu_custom_call.1}
  #allocation0 [shape = 'u32[]', space=smem, size = 0x4, offset = 0x4, fixed_abs, tag = 'smem constant byte address 0x4 - core index']
  #allocation1 [shape = 'u32[144,128]{1,0:T(1,128)}', space=vmem, size = 0x12000, scoped, tag = 'internal scratch']
  #allocation2 [shape = 'f32[8,128]{1,0:T(8,128)}', space=vmem, size = 0x1000, scoped, tag = 'scratch operand']
  #allocation3 [shape = 's32[1]{0}', space=sflag, size = 0x4, scoped, tag = 'scoped memory for tpu_custom_call.1']
  #allocation4 [shape = 'u8[512]{0}', space=smem, size = 0x200, scoped, tag = 'prefetched SMEM operand 0']
  #allocation5 [shape = 'u8[512]{0}', space=smem, size = 0x200, scoped, tag = 'prefetched SMEM operand 1']
  %s0 = inlined_call_operand.vmem [shape: s32[16], index: 0, kind: input, shape index: {}]
  %s1 = inlined_call_operand.vmem [shape: s32[16], index: 1, kind: input, shape index: {}]
  %s2 = inlined_call_operand.hbm [shape: f32[32,128], index: 2, kind: input, shape index: {}]
  %s3 = inlined_call_operand.hbm [shape: f32[128,128], index: 3, kind: input, shape index: {}]
  %s4 = inlined_call_operand.vmem [shape: f32[1,128], index: 4, kind: input, shape index: {}]
  %s5 = inlined_call_operand.vmem [shape: f32[8,1], index: 5, kind: input, shape index: {}]
  %s6 = inlined_call_operand.hbm [shape: f32[8,128], index: 6, kind: output, shape index: {}]
  %s7 = sld [smem:[#allocation0]]
  $region65: #{tpu_custom_call.1} parent=0
    _
  %s9 = ssub.s32 1, %s7
  %s10 = scalar_select 0, %s9, %s7
  %s11 = sshll.u32 %s0, 4
  %s12 = int_to_ptr.vmem [resolvable:$true] %s11
  %14 = dma.vmem_to_smem %s12, 16, [#allocation4], [#allocation3]
  %s15 = sshll.u32 %s1, 4
  %s16 = int_to_ptr.vmem [resolvable:$true] %s15
  %18 = dma.vmem_to_smem %s16, 16, [#allocation5], [#allocation3]
  %19 = dma.done [#allocation3], 32
  %20 = sfence
  $region1: #{tpu_custom_call.1} parent=0
    #allocation6 [shape = 'u8[16384]{0}', space=vmem, size = 0x4000, scoped, tag = 'input window, operand 2, single buffered']
    #allocation7 [shape = 's32[2]{0}', space=sflag, size = 0x8, scoped, tag = 'scoped memory for tpu_custom_call.1']
    #allocation8 [shape = 's32[2]{0}', space=sflag, size = 0x8, scoped, tag = 'scoped memory for tpu_custom_call.1']
    #allocation9 [shape = 'u8[65536]{0}', space=vmem, size = 0x10000, scoped, tag = 'input window, operand 3, single buffered']
    #allocation10 [shape = 's32[1]{0}', space=sflag, size = 0x4, scoped, tag = 'scoped memory for tpu_custom_call.1']
    #allocation11 [shape = 'u8[4096]{0}', space=vmem, size = 0x1000, scoped, tag = 'output window, operand 0, single buffered']
    %21 = vsyncpa [#allocation7], 0
    %22 = vsyncpa [#allocation10], 0
    %23 = vsyncpa [#allocation8], 0
    loop: start=0, step=1, limit=4
    $region2: #{tpu_custom_call.1} parent=1 // loop_pre_header
      _
    $region3: #{tpu_custom_call.1} parent=1 // loop_header
      %s25 = sphi 0, %s29
      %p26 = scmp.ge.s32.totalorder %s25, 4
      %s33 = sphi 0, %s33
      %s35 = sphi 0, %s33
      %s36 = sphi 0, %s35
      %s50 = sphi 0, %s36
      %s54 = sphi 0, %s54
      %s56 = sphi 0, %s54
      %s57 = sphi 0, %s56
      %s71 = sphi 0, %s57
      %s75 = sphi 0, %s75
      %s77 = sphi 0, %s75
      %s78 = sphi 0, %s77
      %s92 = sphi 0, %s78
      %s96 = sphi 0, %s96
      %s98 = sphi 0, %s96
      %s99 = sphi 0, %s98
      %s113 = sphi 0, %s99
      %s117 = sphi 0, %s117
      %s119 = sphi 0, %s117
      %s120 = sphi 0, %s119
      %s134 = sphi 0, %s120
    $region4: #{tpu_custom_call.1} parent=1 // loop_header_branch
      %28 = sbr.rel (%p26) target = $region8
    $region5: #{tpu_custom_call.1} parent=1 // loop_body
      %s30 = ssub.s32 %s25, 1
      %s31 = ssub.s32 %s25, 2
      %s32 = sadd.s32 %s25, 1
      %s34 = sadd.s32 %s33, 1
      %p37 = scmp.eq.s32.totalorder %s25, 1
      %p38 = scmp.ne.s32.totalorder %s33, %s35
      %p39 = scmp.eq.s32.totalorder %s25, 0
      %p40 = por %p38, %p39
      %p41 = scmp.ne.s32.totalorder %s33, %s35
      %p42 = scmp.eq.s32.totalorder %s30, 1
      %p43 = por %p41, %p42
      %p44 = scmp.ne.s32.totalorder %s35, %s36
      %p45 = scmp.eq.s32.totalorder %s30, 0
      %p46 = por %p44, %p45
      %p47 = scmp.ne.s32.totalorder %s35, %s36
      %p48 = scmp.eq.s32.totalorder %s31, 1
      %p49 = por %p47, %p48
      %p51 = scmp.ne.s32.totalorder %s36, %s50
      %p52 = scmp.eq.s32.totalorder %s31, 0
      %p53 = por %p51, %p52
      %s55 = sadd.s32 %s54, 1
      %p58 = scmp.eq.s32.totalorder %s25, 1
      %p59 = scmp.ne.s32.totalorder %s54, %s56
      %p60 = scmp.eq.s32.totalorder %s25, 0
      %p61 = por %p59, %p60
      %p62 = scmp.ne.s32.totalorder %s54, %s56
      %p63 = scmp.eq.s32.totalorder %s30, 1
      %p64 = por %p62, %p63
      %p65 = scmp.ne.s32.totalorder %s56, %s57
      %p66 = scmp.eq.s32.totalorder %s30, 0
      %p67 = por %p65, %p66
      %p68 = scmp.ne.s32.totalorder %s56, %s57
      %p69 = scmp.eq.s32.totalorder %s31, 1
      %p70 = por %p68, %p69
      %p72 = scmp.ne.s32.totalorder %s57, %s71
      %p73 = scmp.eq.s32.totalorder %s31, 0
      %p74 = por %p72, %p73
      %s76 = sadd.s32 %s75, 1
      %p79 = scmp.eq.s32.totalorder %s25, 1
      %p80 = scmp.ne.s32.totalorder %s75, %s77
      %p81 = scmp.eq.s32.totalorder %s25, 0
      %p82 = por %p80, %p81
      %p83 = scmp.ne.s32.totalorder %s75, %s77
      %p84 = scmp.eq.s32.totalorder %s30, 1
      %p85 = por %p83, %p84
      %p86 = scmp.ne.s32.totalorder %s77, %s78
      %p87 = scmp.eq.s32.totalorder %s30, 0
      %p88 = por %p86, %p87
      %p89 = scmp.ne.s32.totalorder %s77, %s78
      %p90 = scmp.eq.s32.totalorder %s31, 1
      %p91 = por %p89, %p90
      %p93 = scmp.ne.s32.totalorder %s78, %s92
      %p94 = scmp.eq.s32.totalorder %s31, 0
      %p95 = por %p93, %p94
      %s97 = sadd.s32 %s96, 1
      %p100 = scmp.eq.s32.totalorder %s25, 1
      %p101 = scmp.ne.s32.totalorder %s96, %s98
      %p102 = scmp.eq.s32.totalorder %s25, 0
      %p103 = por %p101, %p102
      %p104 = scmp.ne.s32.totalorder %s96, %s98
      %p105 = scmp.eq.s32.totalorder %s30, 1
      %p106 = por %p104, %p105
      %p107 = scmp.ne.s32.totalorder %s98, %s99
      %p108 = scmp.eq.s32.totalorder %s30, 0
      %p109 = por %p107, %p108
      %p110 = scmp.ne.s32.totalorder %s98, %s99
      %p111 = scmp.eq.s32.totalorder %s31, 1
      %p112 = por %p110, %p111
      %p114 = scmp.ne.s32.totalorder %s99, %s113
      %p115 = scmp.eq.s32.totalorder %s31, 0
      %p116 = por %p114, %p115
      %s118 = sadd.s32 %s117, 1
      %p121 = scmp.eq.s32.totalorder %s25, 1
      %p122 = scmp.ne.s32.totalorder %s117, %s119
      %p123 = scmp.eq.s32.totalorder %s25, 0
      %p124 = por %p122, %p123
      %p125 = scmp.ne.s32.totalorder %s117, %s119
      %p126 = scmp.eq.s32.totalorder %s30, 1
      %p127 = por %p125, %p126
      %p128 = scmp.ne.s32.totalorder %s119, %s120
      %p129 = scmp.eq.s32.totalorder %s30, 0
      %p130 = por %p128, %p129
      %p131 = scmp.ne.s32.totalorder %s119, %s120
      %p132 = scmp.eq.s32.totalorder %s31, 1
      %p133 = por %p131, %p132
      %p135 = scmp.ne.s32.totalorder %s120, %s134
      %p136 = scmp.eq.s32.totalorder %s31, 0
      %p137 = por %p135, %p136
      %p138 = scmp.le.s32.totalorder 1, %s25
      %p139 = scmp.lt.s32.totalorder %s25, 3
      %p140 = pnand %p138, %p139
      %p141 = pneg %p140
      // Predicated region
      $region9: #{tpu_custom_call.1} parent=5 // pred_check
        _
      $region10: #{tpu_custom_call.1} parent=5 // pred_check_branch
        %143 = sbr.rel (%p140) target = $region12
      $region11: #{tpu_custom_call.1} parent=5 // pred_region
        %s144 = ssub.s32 %s25, 1
        // Predicated region
        $region13: #{tpu_custom_call.1} parent=11 // pred_check
          %p145 = pneg %p46
        $region14: #{tpu_custom_call.1} parent=11 // pred_check_branch
          %147 = sbr.rel (%p145) target = $region16
        $region15: #{tpu_custom_call.1} parent=11 // pred_region
          %s149 = ssub.s32 512, 512
          %150 = vsyncadd [#allocation7], %s149
          %s151 = sshll.u32 [#allocation6], 4
          %s152 = int_to_ptr.vmem [resolvable:$true] %s151
          %157 = dma.hbm_to_vmem [thread:$0]  %s2, 512, %s152, [#allocation7], 128, 128, 8
        $region16: #{tpu_custom_call.1} parent=11 // pred_fallthru
          _
        // Predicated region
        $region17: #{tpu_custom_call.1} parent=11 // pred_check
          %p158 = pneg %p67
        $region18: #{tpu_custom_call.1} parent=11 // pred_check_branch
          %160 = sbr.rel (%p158) target = $region20
        $region19: #{tpu_custom_call.1} parent=11 // pred_region
          %s162 = ssub.s32 2048, 2048
          %163 = vsyncadd [#allocation10], %s162
          %s164 = sshll.u32 [#allocation9], 4
          %s165 = int_to_ptr.vmem [resolvable:$true] %s164
          %170 = dma.hbm_to_vmem [thread:$0]  %s3, 2048, %s165, [#allocation10], 128, 128, 8
        $region20: #{tpu_custom_call.1} parent=11 // pred_fallthru
          _
        // Predicated region
        $region21: #{tpu_custom_call.1} parent=11 // pred_check
          %p171 = pneg %p88
        $region22: #{tpu_custom_call.1} parent=11 // pred_check_branch
          %173 = sbr.rel (%p171) target = $region24
        $region23: #{tpu_custom_call.1} parent=11 // pred_region
          _
        $region24: #{tpu_custom_call.1} parent=11 // pred_fallthru
          _
        // Predicated region
        $region25: #{tpu_custom_call.1} parent=11 // pred_check
          %p174 = pneg %p109
        $region26: #{tpu_custom_call.1} parent=11 // pred_check_branch
          %176 = sbr.rel (%p174) target = $region28
        $region27: #{tpu_custom_call.1} parent=11 // pred_region
          _
        $region28: #{tpu_custom_call.1} parent=11 // pred_fallthru
          _
      $region12: #{tpu_custom_call.1} parent=5 // pred_fallthru
        _
      %p177 = scmp.lt.s32.totalorder %s25, 2
      // Predicated region
      $region29: #{tpu_custom_call.1} parent=5 // pred_check
        %p178 = pneg %p177
      $region30: #{tpu_custom_call.1} parent=5 // pred_check_branch
        %180 = sbr.rel (%p178) target = $region32
      $region31: #{tpu_custom_call.1} parent=5 // pred_region
        _
      $region32: #{tpu_custom_call.1} parent=5 // pred_fallthru
        _
      %p181 = scmp.le.s32.totalorder 1, %s25
      %p182 = scmp.lt.s32.totalorder %s25, 3
      %p183 = pnand %p181, %p182
      %p184 = pneg %p183
      // Predicated region
      $region33: #{tpu_custom_call.1} parent=5 // pred_check
        _
      $region34: #{tpu_custom_call.1} parent=5 // pred_check_branch
        %186 = sbr.rel (%p183) target = $region36
      $region35: #{tpu_custom_call.1} parent=5 // pred_region
        %s187 = ssub.s32 %s25, 1
        // Predicated region
        $region37: #{tpu_custom_call.1} parent=35 // pred_check
          %p188 = pneg %p46
        $region38: #{tpu_custom_call.1} parent=35 // pred_check_branch
          %190 = sbr.rel (%p188) target = $region40
        $region39: #{tpu_custom_call.1} parent=35 // pred_region
          %191 = dma.done [#allocation7], 512
        $region40: #{tpu_custom_call.1} parent=35 // pred_fallthru
          _
        // Predicated region
        $region41: #{tpu_custom_call.1} parent=35 // pred_check
          %p192 = pneg %p67
        $region42: #{tpu_custom_call.1} parent=35 // pred_check_branch
          %194 = sbr.rel (%p192) target = $region44
        $region43: #{tpu_custom_call.1} parent=35 // pred_region
          %195 = dma.done [#allocation10], 2048
        $region44: #{tpu_custom_call.1} parent=35 // pred_fallthru
          _
        %p196 = pneg %p46
        %p197 = pneg %p43
        %p198 = pneg %p67
        %p199 = pneg %p64
        %p200 = pneg %p88
        %p201 = pneg %p85
        %p202 = pneg %p109
        %p203 = pneg %p106
        %p204 = pneg %p130
        %p205 = pneg %p127
        %p206 = scmp.eq.s32.totalorder %s30, 0
        // Predicated region
        $region45: #{tpu_custom_call.1} parent=35 // pred_check
          %p207 = pneg %p206
        $region46: #{tpu_custom_call.1} parent=35 // pred_check_branch
          %209 = sbr.rel (%p207) target = $region48
        $region47: #{tpu_custom_call.1} parent=35 // pred_region
          %210 = vst [vmem:[#allocation2] sm:$0xff] 0.0
        $region48: #{tpu_custom_call.1} parent=35 // pred_fallthru
          _
        %s211 = smul.u32 %s30, 8
        %s212 = sld [smem:[#allocation4 + %s211]]
        %s213 = scalar_lea.vmem [#allocation6], %s212
        %v214 = vld [vmem:[%s213] sm:$0x1]
        %s215 = sld [smem:[#allocation5 + %s211]]
        %s216 = scalar_lea.vmem [#allocation2], %s215
        %v217 = vld [vmem:[%s216] sm:$0x1]
        %v218 = vadd.f32 %v217, %v214
        %219 = vst [vmem:[%s216] sm:$0x1] %v218
        %s220 = sadd.s32 %s211, 1
        %s221 = sld [smem:[#allocation4 + %s220]]
        %s222 = scalar_lea.vmem [#allocation6], %s221
        %v223 = vld [vmem:[%s222] sm:$0x1]
        %s224 = sld [smem:[#allocation5 + %s220]]
        %s225 = scalar_lea.vmem [#allocation2], %s224
        %v226 = vld [vmem:[%s225] sm:$0x1]
        %v227 = vadd.f32 %v226, %v223
        %228 = vst [vmem:[%s225] sm:$0x1] %v227
        %s229 = sadd.s32 %s211, 2
        %s230 = sld [smem:[#allocation4 + %s229]]
        %s231 = scalar_lea.vmem [#allocation6], %s230
        %v232 = vld [vmem:[%s231] sm:$0x1]
        %s233 = sld [smem:[#allocation5 + %s229]]
        %s234 = scalar_lea.vmem [#allocation2], %s233
        %v235 = vld [vmem:[%s234] sm:$0x1]
        %v236 = vadd.f32 %v235, %v232
        %237 = vst [vmem:[%s234] sm:$0x1] %v236
        %s238 = sadd.s32 %s211, 3
        %s239 = sld [smem:[#allocation4 + %s238]]
        %s240 = scalar_lea.vmem [#allocation6], %s239
        %v241 = vld [vmem:[%s240] sm:$0x1]
        %s242 = sld [smem:[#allocation5 + %s238]]
        %s243 = scalar_lea.vmem [#allocation2], %s242
        %v244 = vld [vmem:[%s243] sm:$0x1]
        %v245 = vadd.f32 %v244, %v241
        %246 = vst [vmem:[%s243] sm:$0x1] %v245
        %s247 = sadd.s32 %s211, 4
        %s248 = sld [smem:[#allocation4 + %s247]]
        %s249 = scalar_lea.vmem [#allocation6], %s248
        %v250 = vld [vmem:[%s249] sm:$0x1]
        %s251 = sld [smem:[#allocation5 + %s247]]
        %s252 = scalar_lea.vmem [#allocation2], %s251
        %v253 = vld [vmem:[%s252] sm:$0x1]
        %v254 = vadd.f32 %v253, %v250
        %255 = vst [vmem:[%s252] sm:$0x1] %v254
        %s256 = sadd.s32 %s211, 5
        %s257 = sld [smem:[#allocation4 + %s256]]
        %s258 = scalar_lea.vmem [#allocation6], %s257
        %v259 = vld [vmem:[%s258] sm:$0x1]
        %s260 = sld [smem:[#allocation5 + %s256]]
        %s261 = scalar_lea.vmem [#allocation2], %s260
        %v262 = vld [vmem:[%s261] sm:$0x1]
        %v263 = vadd.f32 %v262, %v259
        %264 = vst [vmem:[%s261] sm:$0x1] %v263
        %s265 = sadd.s32 %s211, 6
        %s266 = sld [smem:[#allocation4 + %s265]]
        %s267 = scalar_lea.vmem [#allocation6], %s266
        %v268 = vld [vmem:[%s267] sm:$0x1]
        %s269 = sld [smem:[#allocation5 + %s265]]
        %s270 = scalar_lea.vmem [#allocation2], %s269
        %v271 = vld [vmem:[%s270] sm:$0x1]
        %v272 = vadd.f32 %v271, %v268
        %273 = vst [vmem:[%s270] sm:$0x1] %v272
        %s274 = sadd.s32 %s211, 7
        %s275 = sld [smem:[#allocation4 + %s274]]
        %s276 = scalar_lea.vmem [#allocation6], %s275
        %v277 = vld [vmem:[%s276] sm:$0x1]
        %s278 = sld [smem:[#allocation5 + %s274]]
        %s279 = scalar_lea.vmem [#allocation2], %s278
        %v280 = vld [vmem:[%s279] sm:$0x1]
        %v281 = vadd.f32 %v280, %v277
        %282 = vst [vmem:[%s279] sm:$0x1] %v281
        %p283 = scmp.eq.s32.totalorder %s30, 1
        // Predicated region
        $region49: #{tpu_custom_call.1} parent=35 // pred_check
          %p284 = pneg %p283
        $region50: #{tpu_custom_call.1} parent=35 // pred_check_branch
          %286 = sbr.rel (%p284) target = $region52
        $region51: #{tpu_custom_call.1} parent=35 // pred_region
          %v287 = vld [vmem:[#allocation2] sm:$0xff]
          %v288 = vld [vmem:[%s5] sm:$0xff]
          %290 = vset.pattern.permute.xlu0 0
          %291 = vperm.xlu0 %290, %v288
          %v292 = vpop.permute.xlu0 %291
          %v294 = vmul.f32 %v287, %v292
          %v295 = vld [vmem:[#allocation9] sm:$0xff]
          %v296 = vld [vmem:[#allocation9 + $0x8] sm:$0xff]
          %v297 = vld [vmem:[#allocation9 + $0x10] sm:$0xff]
          %v298 = vld [vmem:[#allocation9 + $0x18] sm:$0xff]
          %v299 = vld [vmem:[#allocation9 + $0x20] sm:$0xff]
          %v300 = vld [vmem:[#allocation9 + $0x28] sm:$0xff]
          %v301 = vld [vmem:[#allocation9 + $0x30] sm:$0xff]
          %v302 = vld [vmem:[#allocation9 + $0x38] sm:$0xff]
          %v303 = vld [vmem:[#allocation9 + $0x40] sm:$0xff]
          %v304 = vld [vmem:[#allocation9 + $0x48] sm:$0xff]
          %v305 = vld [vmem:[#allocation9 + $0x50] sm:$0xff]
          %v306 = vld [vmem:[#allocation9 + $0x58] sm:$0xff]
          %v307 = vld [vmem:[#allocation9 + $0x60] sm:$0xff]
          %v308 = vld [vmem:[#allocation9 + $0x68] sm:$0xff]
          %v309 = vld [vmem:[#allocation9 + $0x70] sm:$0xff]
          %v310 = vld [vmem:[#allocation9 + $0x78] sm:$0xff]
          %v311 = vld [vmem:[%s4] sm:$0x1]
          %v313 = vlaneseq
          %v314 = vshrl.u32 %v313, 7
          %v315 = vsub.s32 0, %v314
          %v316 = vrot.slane %v311, %v315
          %318 = vmatprep.subr.mxu0 0.0
          %319 = vmatpush1.msra.mxu0 %v295
          %320 = vmatprep.subr.mxu0 0.0
          %321 = vmatpush1.msra.mxu0 %v296
          %322 = vmatprep.subr.mxu0 0.0
          %323 = vmatpush1.msra.mxu0 %v297
          %324 = vmatprep.subr.mxu0 0.0
          %325 = vmatpush1.msra.mxu0 %v298
          %326 = vmatprep.subr.mxu0 0.0
          %327 = vmatpush1.msra.mxu0 %v299
          %328 = vmatprep.subr.mxu0 0.0
          %329 = vmatpush1.msra.mxu0 %v300
          %330 = vmatprep.subr.mxu0 0.0
          %331 = vmatpush1.msra.mxu0 %v301
          %332 = vmatprep.subr.mxu0 0.0
          %333 = vmatpush1.msra.mxu0 %v302
          %334 = vmatprep.subr.mxu0 0.0
          %335 = vmatpush1.msra.mxu0 %v303
          %336 = vmatprep.subr.mxu0 0.0
          %337 = vmatpush1.msra.mxu0 %v304
          %338 = vmatprep.subr.mxu0 0.0
          %339 = vmatpush1.msra.mxu0 %v305
          %340 = vmatprep.subr.mxu0 0.0
          %341 = vmatpush1.msra.mxu0 %v306
          %342 = vmatprep.subr.mxu0 0.0
          %343 = vmatpush1.msra.mxu0 %v307
          %344 = vmatprep.subr.mxu0 0.0
          %345 = vmatpush1.msra.mxu0 %v308
          %346 = vmatprep.subr.mxu0 0.0
          %347 = vmatpush1.msra.mxu0 %v309
          %348 = vmatprep.subr.mxu0 0.0
          %349 = vmatpush1.msra.mxu0 %v310
          %350 = vmatprep.subr.mxu0 0.0
          %351 = vmatpush1.msra.mxu0 0.0
          %352 = vmatprep.subr.mxu0 0.0
          %353 = vmatpush1.msra.mxu0 0.0
          %354 = vmatprep.subr.mxu0 0.0
          %355 = vmatpush1.msra.mxu0 0.0
          %356 = vmatprep.subr.mxu0 0.0
          %357 = vmatpush1.msra.mxu0 0.0
          %358 = vmatprep.subr.mxu0 0.0
          %359 = vmatpush1.msra.mxu0 0.0
          %360 = vmatprep.subr.mxu0 0.0
          %361 = vmatpush1.msra.mxu0 0.0
          %362 = vmatprep.subr.mxu0 0.0
          %363 = vmatpush1.msra.mxu0 0.0
          %364 = vmatprep.subr.mxu0 0.0
          %365 = vmatpush1.msra.mxu0 0.0
          %366 = vmatprep.subr.mxu0 0.0
          %367 = vmatpush1.msra.mxu0 0.0
          %368 = vmatprep.subr.mxu0 0.0
          %369 = vmatpush1.msra.mxu0 0.0
          %370 = vmatprep.subr.mxu0 0.0
          %371 = vmatpush1.msra.mxu0 0.0
          %372 = vmatprep.subr.mxu0 0.0
          %373 = vmatpush1.msra.mxu0 0.0
          %374 = vmatprep.subr.mxu0 0.0
          %375 = vmatpush1.msra.mxu0 0.0
          %376 = vmatprep.subr.mxu0 0.0
          %377 = vmatpush1.msra.mxu0 0.0
          %378 = vmatprep.subr.mxu0 0.0
          %379 = vmatpush1.msra.mxu0 0.0
          %380 = vmatprep.subr.mxu0 0.0
          %381 = vmatpush1.msra.mxu0 0.0
          %382 = vmatprep.mubr.f32.mxu0 0.0
          %383 = vmatmul.mubr.f32.gmra.mrb[0].mxu0 %v294
          %v384 = vpop.f32.mrb[0].mxu0
          %v385 = vadd.f32 %v316, %v384
          %v386 = vpop.f32.mrb[0].mxu0
          %387 = vdwg.mxu0
          %388 = vst [vmem:[#allocation11] sm:$0xff] %v385
        $region52: #{tpu_custom_call.1} parent=35 // pred_fallthru
          _
        // Predicated region
        $region53: #{tpu_custom_call.1} parent=35 // pred_check
          %p389 = pneg %p127
        $region54: #{tpu_custom_call.1} parent=35 // pred_check_branch
          %391 = sbr.rel (%p389) target = $region56
        $region55: #{tpu_custom_call.1} parent=35 // pred_region
          %s393 = ssub.s32 128, 128
          %394 = vsyncadd [#allocation8], %s393
          %s396 = sshll.u32 [#allocation11], 4
          %s397 = int_to_ptr.vmem [resolvable:$true] %s396
          %399 = dma.vmem_to_hbm [thread:$0]  %s397, 128, %s6, [#allocation8]
        $region56: #{tpu_custom_call.1} parent=35 // pred_fallthru
          _
        // Predicated region
        $region57: #{tpu_custom_call.1} parent=35 // pred_check
          %p400 = pneg %p127
        $region58: #{tpu_custom_call.1} parent=35 // pred_check_branch
          %402 = sbr.rel (%p400) target = $region60
        $region59: #{tpu_custom_call.1} parent=35 // pred_region
          %403 = dma.done [#allocation8], 128
        $region60: #{tpu_custom_call.1} parent=35 // pred_fallthru
          _
      $region36: #{tpu_custom_call.1} parent=5 // pred_fallthru
        _
      %p404 = scmp.le.s32.totalorder 2, %s25
      // Predicated region
      $region61: #{tpu_custom_call.1} parent=5 // pred_check
        %p405 = pneg %p404
      $region62: #{tpu_custom_call.1} parent=5 // pred_check_branch
        %407 = sbr.rel (%p405) target = $region64
      $region63: #{tpu_custom_call.1} parent=5 // pred_region
        %s408 = ssub.s32 %s25, 2
      $region64: #{tpu_custom_call.1} parent=5 // pred_fallthru
        _
    $region6: #{tpu_custom_call.1} parent=1 // loop_footer
      %s29 = sadd.s32 1, %s25
    $region7: #{tpu_custom_call.1} parent=1 // loop_footer_branch
      %24 = sbr.rel target = $region3
    $region8: #{tpu_custom_call.1} parent=1 // loop_exit
      _
    %409 = vsyncpa [#allocation7], 1
    %s410 = scalar_lea.sflag [#allocation7], 1
    %411 = vsyncpa %s410, 1
    %412 = vsyncpa [#allocation10], 1
    %413 = vsyncpa [#allocation8], 1
    %s414 = scalar_lea.sflag [#allocation8], 1
    %415 = vsyncpa %s414, 1

</llo_original>
